<compile_context>
chip_gen: v6e
topology: v6e:2x2x1
jax: 0.10.0
libtpu: 0.0.40
codegen_flags: <defaults>
</compile_context>

<pallas_src>
import functools
import math

import jax
import jax.numpy as jnp
from jax.experimental import pallas as pl
from jax.experimental.pallas import tpu as pltpu


def _round_up(v: int, m: int) -> int:
    return (v + m - 1) // m * m


# ---------------------------------------------------------------------------
# Pallas kernel: fc-pack -> selective ReLU -> fc-pack -> selective sin
# ---------------------------------------------------------------------------
def _predictor_kernel(x_ref, w1_ref, b1_ref, pm_ref, w2_ref, b2_ref, tm_ref,
                      out_ref):
    # x: (TN, Kp) f32 ; w1: (Kp, MID) bf16 ; w2: (MID, OUT) bf16 ;
    # biases / masks: (1, MID) / (1, OUT) f32.
    x = x_ref[...].astype(jnp.bfloat16)

    # Stage 1: one MXU push computes [ellipse_hidden | cls_scores] together.
    z = jnp.dot(x, w1_ref[...], preferred_element_type=jnp.float32) + b1_ref[...]

    # ReLU only on the hidden columns. pass_mask is 1.0 on cls (pass-through)
    # columns, 0.0 elsewhere:  max(z, z*1) = z ; max(z, z*0) = relu(z).
    u = jnp.maximum(z, z * pm_ref[...])

    # Stage 2: one MXU push produces the lane-dense output layout
    #   [0:C)        -> cls scores (identity rows of w2)
    #   [C:C+6C)     -> per-class [da, db, dcx, dcy, dsin_arg, dcos_arg]
    #   [C+6C:OUT)   -> zero padding
    # The 2*theta scale and the cos phase (pi/2) are already folded into
    # w2/b2 host-side, so a single sin pass on the masked columns finishes it.
    r = jnp.dot(u.astype(jnp.bfloat16), w2_ref[...],
                preferred_element_type=jnp.float32) + b2_ref[...]
    out_ref[...] = jnp.where(tm_ref[...] != 0.0, jnp.sin(r), r)


# ---------------------------------------------------------------------------
# Host-side parameter packing (done once)
# ---------------------------------------------------------------------------
def pack_params(wc, bc, w1, b1, w2, b2):
    """Pack the three Linear layers into two lane-dense bf16 weights + masks.

    Layouts (already transposed w.r.t. torch, i.e. y = x @ W + b):
      wc: (K, C)   bc: (C,)     -- cls_score
      w1: (K, H)   b1: (H,)     -- ellipse_pred[0], H = K // 4
      w2: (H, 5C)  b2: (5C,)    -- ellipse_pred[2]
    """
    K, C = wc.shape
    H = w1.shape[1]
    Kp = _round_up(K, 128)
    MID = _round_up(H + C, 128)
    OUT = _round_up(7 * C, 128)   # C score cols + 6C delta cols, lane-padded

    # Stage-1 packed weight: [ellipse hidden | cls scores]
    w1cat = jnp.zeros((Kp, MID), jnp.float32)
    w1cat = w1cat.at[:K, :H].set(w1).at[:K, H:H + C].set(wc)
    b1cat = jnp.zeros((1, MID), jnp.float32)
    b1cat = b1cat.at[0, :H].set(b1).at[0, H:H + C].set(bc)
    # 1.0 on the cls (no-ReLU) columns, 0.0 on hidden / padded columns.
    pass_mask = jnp.zeros((1, MID), jnp.float32).at[0, H:H + C].set(1.0)

    # Stage-2: map raw 5-per-class columns to the 6-per-class layout,
    # duplicating theta into both dsin and dcos slots.  Fold the 2x scale into
    # both trig columns and the +pi/2 phase into the dcos bias so the kernel
    # only needs a single sin() pass (cos(2t) = sin(2t + pi/2)).
    src, scale, phase, trig = [], [], [], []
    for c in range(C):
        src += [5 * c + 0, 5 * c + 1, 5 * c + 2, 5 * c + 3, 5 * c + 4, 5 * c + 4]
        scale += [1.0, 1.0, 1.0, 1.0, 2.0, 2.0]
        phase += [0.0, 0.0, 0.0, 0.0, 0.0, math.pi / 2.0]
        trig += [0.0, 0.0, 0.0, 0.0, 1.0, 1.0]
    src = jnp.asarray(src, jnp.int32)
    scale = jnp.asarray(scale, jnp.float32)
    phase = jnp.asarray(phase, jnp.float32)
    trig = jnp.asarray(trig, jnp.float32)

    w2big = jnp.zeros((MID, OUT), jnp.float32)
    w2big = w2big.at[:H, C:C + 6 * C].set(w2[:, src] * scale[None, :])
    w2big = w2big.at[jnp.arange(C) + H, jnp.arange(C)].set(1.0)  # cls pass-through
    b2big = jnp.zeros((1, OUT), jnp.float32)
    b2big = b2big.at[0, C:C + 6 * C].set(b2[src] * scale + phase)
    trig_mask = jnp.zeros((1, OUT), jnp.float32).at[0, C:C + 6 * C].set(trig)

    return (w1cat.astype(jnp.bfloat16), b1cat, pass_mask,
            w2big.astype(jnp.bfloat16), b2big, trig_mask)


# ---------------------------------------------------------------------------
# Forward wrapper (== EllipseRCNNPredictor.forward)
# ---------------------------------------------------------------------------
@functools.partial(jax.jit, static_argnames=("num_classes",))
def ellipse_rcnn_predictor(x, w1, b1, pass_mask, w2, b2, trig_mask, *,
                           num_classes: int):
    n = x.shape[0]
    x2 = x.reshape(n, -1).astype(jnp.float32)          # flatten(start_dim=1)
    k = x2.shape[1]

    kp, mid = w1.shape
    out_w = w2.shape[1]
    if kp != k:                                        # pad K to multiple of 128
        x2 = jnp.pad(x2, ((0, 0), (0, kp - k)))

    # RoI tile: as large as possible (amortize the ~0.35us per-step pipeline
    # overhead), balanced across tiles so awkward N don't pad a whole extra
    # tile, and >=2 grid steps once there is enough work so v7x's two
    # TensorCores both get rows.  (~2 MiB/step VMEM at tn=1024 — no limit hit.)
    cap = 1024
    num_tiles = max(1, pl.cdiv(max(n, 1), cap))
    if n > 256:
        num_tiles = max(num_tiles, 2)
    tn = _round_up(pl.cdiv(max(n, 1), num_tiles), 8)
    n_pad = _round_up(max(n, 1), tn)
    if n_pad != n:
        x2 = jnp.pad(x2, ((0, n_pad - n), (0, 0)))

    out = pl.pallas_call(
        _predictor_kernel,
        out_shape=jax.ShapeDtypeStruct((n_pad, out_w), jnp.float32),
        grid=(n_pad // tn,),
        in_specs=[
            pl.BlockSpec((tn, kp), lambda i: (i, 0)),       # x tile
            pl.BlockSpec((kp, mid), lambda i: (0, 0)),      # packed W1 (invariant)
            pl.BlockSpec((1, mid), lambda i: (0, 0)),       # packed b1
            pl.BlockSpec((1, mid), lambda i: (0, 0)),       # ReLU pass-through mask
            pl.BlockSpec((mid, out_w), lambda i: (0, 0)),   # packed W2 (invariant)
            pl.BlockSpec((1, out_w), lambda i: (0, 0)),     # packed b2 (scale/phase folded)
            pl.BlockSpec((1, out_w), lambda i: (0, 0)),     # trig-column mask
        ],
        out_specs=pl.BlockSpec((tn, out_w), lambda i: (i, 0)),
        compiler_params=pltpu.CompilerParams(
            dimension_semantics=("parallel",)),             # shard RoIs across v7x TCs
    )(x2, w1, b1, pass_mask, w2, b2, trig_mask)

    # Slice the padded lane-dense output ONCE to the live columns, then split
    # the small (n, 7C) slab (avoids two full re-reads of the padded output).
    head = jax.lax.slice(out, (0, 0), (n, 7 * num_classes))
    scores = head[:, :num_classes]
    ellipse_deltas = head[:, num_classes:]
    return scores, ellipse_deltas


# ---------------------------------------------------------------------------
if __name__ == "__main__":
    key = jax.random.PRNGKey(0)
    k_x, k_wc, k_bc, k_w1, k_b1, k_w2, k_b2 = jax.random.split(key, 7)

    # Small shapes consistent with the module: pooled RoI features (N, C, P, P)
    # flatten to in_channels = 2*8*8 = 128; hidden = in_channels // 4 = 32.
    num_rois, feat_c, pool = 16, 2, 8
    in_channels = feat_c * pool * pool
    num_classes = 3
    hidden = in_channels // 4

    x = jax.random.normal(k_x, (num_rois, feat_c, pool, pool), jnp.float32)

    wc = 0.05 * jax.random.normal(k_wc, (in_channels, num_classes), jnp.float32)
    bc = 0.10 * jax.random.normal(k_bc, (num_classes,), jnp.float32)
    w1 = 0.05 * jax.random.normal(k_w1, (in_channels, hidden), jnp.float32)
    b1 = 0.10 * jax.random.normal(k_b1, (hidden,), jnp.float32)
    w2 = 0.05 * jax.random.normal(k_w2, (hidden, num_classes * 5), jnp.float32)
    b2 = 0.10 * jax.random.normal(k_b2, (num_classes * 5,), jnp.float32)

    pw1, pb1, pmask, pw2, pb2, tmask = pack_params(wc, bc, w1, b1, w2, b2)
    scores, deltas = ellipse_rcnn_predictor(
        x, pw1, pb1, pmask, pw2, pb2, tmask, num_classes=num_classes)
    jax.block_until_ready(scores)
    jax.block_until_ready(deltas)

    # Pure-JAX f32 reference of EllipseRCNNPredictor.forward.
    x2 = x.reshape(num_rois, -1)
    ref_scores = x2 @ wc + bc
    h = jnp.maximum(x2 @ w1 + b1, 0.0)
    raw = (h @ w2 + b2).reshape(num_rois, num_classes, 5)
    ref_deltas = jnp.stack(
        [raw[..., 0], raw[..., 1], raw[..., 2], raw[..., 3],
         jnp.sin(2.0 * raw[..., 4]), jnp.cos(2.0 * raw[..., 4])],
        axis=-1).reshape(num_rois, -1)

    assert scores.shape == (num_rois, num_classes)
    assert deltas.shape == (num_rois, num_classes * 6)
    assert bool(jnp.all(jnp.isfinite(scores))) and bool(jnp.all(jnp.isfinite(deltas)))
    # bf16 matmul operands -> tolerance reflects bf16 precision.
    assert jnp.allclose(scores, ref_scores, atol=3e-2, rtol=3e-2), \
        float(jnp.max(jnp.abs(scores - ref_scores)))
    assert jnp.allclose(deltas, ref_deltas, atol=3e-2, rtol=3e-2), \
        float(jnp.max(jnp.abs(deltas - ref_deltas)))
    print("KERNEL_OK")
</pallas_src>

<mosaic_0001>
module attributes {stable_mosaic.version = 11 : i64} {
  func.func @_predictor_kernel(%arg0: i32, %arg1: memref<16x128xf32, #tpu.memory_space<vmem>>, %arg2: memref<128x128xbf16, #tpu.memory_space<vmem>>, %arg3: memref<1x128xf32, #tpu.memory_space<vmem>>, %arg4: memref<1x128xf32, #tpu.memory_space<vmem>>, %arg5: memref<128x128xbf16, #tpu.memory_space<vmem>>, %arg6: memref<1x128xf32, #tpu.memory_space<vmem>>, %arg7: memref<1x128xf32, #tpu.memory_space<vmem>>, %arg8: memref<16x128xf32, #tpu.memory_space<vmem>>) attributes {dimension_semantics = [#tpu.dimension_semantics<parallel>], iteration_bounds = array<i64: 1>, scalar_prefetch = 0 : i64, scratch_operands = 0 : i64, tpu.core_type = #tpu.core_type<tc>, window_params = [{transform_indices = @transform_0, window_bounds = array<i64: 16, 128>}, {pipeline_mode = #tpu.pipeline_mode<synchronous>, transform_indices = @transform_1, window_bounds = array<i64: 128, 128>}, {pipeline_mode = #tpu.pipeline_mode<synchronous>, transform_indices = @transform_2, window_bounds = array<i64: 1, 128>}, {pipeline_mode = #tpu.pipeline_mode<synchronous>, transform_indices = @transform_3, window_bounds = array<i64: 1, 128>}, {pipeline_mode = #tpu.pipeline_mode<synchronous>, transform_indices = @transform_4, window_bounds = array<i64: 128, 128>}, {pipeline_mode = #tpu.pipeline_mode<synchronous>, transform_indices = @transform_5, window_bounds = array<i64: 1, 128>}, {pipeline_mode = #tpu.pipeline_mode<synchronous>, transform_indices = @transform_6, window_bounds = array<i64: 1, 128>}, {transform_indices = @transform_7, window_bounds = array<i64: 16, 128>}]} {
    %c0 = arith.constant 0 : index
    %c0_0 = arith.constant 0 : index
    %0 = vector.load %arg1[%c0, %c0_0] : memref<16x128xf32, #tpu.memory_space<vmem>>, vector<16x128xf32>
    %1 = arith.truncf %0 : vector<16x128xf32> to vector<16x128xbf16>
    %c0_1 = arith.constant 0 : index
    %c0_2 = arith.constant 0 : index
    %2 = vector.load %arg2[%c0_1, %c0_2] : memref<128x128xbf16, #tpu.memory_space<vmem>>, vector<128x128xbf16>
    %cst = arith.constant dense<0.000000e+00> : vector<16x128xf32>
    %3 = tpu.matmul %1, %2, %cst {dimension_numbers = #tpu.dot_dimension_numbers<[1], [0], [0], [1], [0, 0, 1, 1], [], []>} : vector<16x128xbf16>, vector<128x128xbf16>, vector<16x128xf32> -> vector<16x128xf32>
    %c0_3 = arith.constant 0 : index
    %c0_4 = arith.constant 0 : index
    %4 = vector.load %arg3[%c0_3, %c0_4] : memref<1x128xf32, #tpu.memory_space<vmem>>, vector<1x128xf32>
    %5 = vector.broadcast %4 : vector<1x128xf32> to vector<16x128xf32>
    %6 = arith.addf %3, %5 : vector<16x128xf32>
    %c0_5 = arith.constant 0 : index
    %c0_6 = arith.constant 0 : index
    %7 = vector.load %arg4[%c0_5, %c0_6] : memref<1x128xf32, #tpu.memory_space<vmem>>, vector<1x128xf32>
    %8 = vector.broadcast %7 : vector<1x128xf32> to vector<16x128xf32>
    %9 = arith.mulf %6, %8 : vector<16x128xf32>
    %10 = arith.maximumf %6, %9 : vector<16x128xf32>
    %11 = arith.truncf %10 : vector<16x128xf32> to vector<16x128xbf16>
    %c0_7 = arith.constant 0 : index
    %c0_8 = arith.constant 0 : index
    %12 = vector.load %arg5[%c0_7, %c0_8] : memref<128x128xbf16, #tpu.memory_space<vmem>>, vector<128x128xbf16>
    %cst_9 = arith.constant dense<0.000000e+00> : vector<16x128xf32>
    %13 = tpu.matmul %11, %12, %cst_9 {dimension_numbers = #tpu.dot_dimension_numbers<[1], [0], [0], [1], [0, 0, 1, 1], [], []>} : vector<16x128xbf16>, vector<128x128xbf16>, vector<16x128xf32> -> vector<16x128xf32>
    %c0_10 = arith.constant 0 : index
    %c0_11 = arith.constant 0 : index
    %14 = vector.load %arg6[%c0_10, %c0_11] : memref<1x128xf32, #tpu.memory_space<vmem>>, vector<1x128xf32>
    %15 = vector.broadcast %14 : vector<1x128xf32> to vector<16x128xf32>
    %16 = arith.addf %13, %15 : vector<16x128xf32>
    %c0_12 = arith.constant 0 : index
    %c0_13 = arith.constant 0 : index
    %17 = vector.load %arg7[%c0_12, %c0_13] : memref<1x128xf32, #tpu.memory_space<vmem>>, vector<1x128xf32>
    %cst_14 = arith.constant 0.000000e+00 : f32
    %18 = vector.broadcast %cst_14 : f32 to vector<1x128xf32>
    %19 = arith.cmpf one, %17, %18 : vector<1x128xf32>
    %20 = math.sin %16 : vector<16x128xf32>
    %21 = vector.shape_cast %19 : vector<1x128xi1> to vector<1x128xi1>
    %22 = vector.broadcast %21 : vector<1x128xi1> to vector<16x128xi1>
    %23 = arith.select %22, %20, %16 : vector<16x128xi1>, vector<16x128xf32>
    %c0_15 = arith.constant 0 : index
    %c0_16 = arith.constant 0 : index
    %24 = vector.load %arg8[%c0_15, %c0_16] : memref<16x128xf32, #tpu.memory_space<vmem>>, vector<16x128xf32>
    tpu.vector_store %arg8[%c0_15, %c0_16], %23 {strides = array<i32>} : memref<16x128xf32, #tpu.memory_space<vmem>>, vector<16x128xf32>,
    return
  }
  func.func @transform_0(%arg0: i32) -> (i32, i32) {
    %c0_i32 = arith.constant 0 : i32
    %c0_i32_0 = arith.constant 0 : i32
    return %arg0, %c0_i32 : i32, i32
  }
  func.func @transform_1(%arg0: i32) -> (i32, i32) {
    %c0_i32 = arith.constant 0 : i32
    %c0_i32_0 = arith.constant 0 : i32
    %c0_i32_1 = arith.constant 0 : i32
    return %c0_i32, %c0_i32_0 : i32, i32
  }
  func.func @transform_2(%arg0: i32) -> (i32, i32) {
    %c0_i32 = arith.constant 0 : i32
    %c0_i32_0 = arith.constant 0 : i32
    %c0_i32_1 = arith.constant 0 : i32
    return %c0_i32, %c0_i32_0 : i32, i32
  }
  func.func @transform_3(%arg0: i32) -> (i32, i32) {
    %c0_i32 = arith.constant 0 : i32
    %c0_i32_0 = arith.constant 0 : i32
    %c0_i32_1 = arith.constant 0 : i32
    return %c0_i32, %c0_i32_0 : i32, i32
  }
  func.func @transform_4(%arg0: i32) -> (i32, i32) {
    %c0_i32 = arith.constant 0 : i32
    %c0_i32_0 = arith.constant 0 : i32
    %c0_i32_1 = arith.constant 0 : i32
    return %c0_i32, %c0_i32_0 : i32, i32
  }
  func.func @transform_5(%arg0: i32) -> (i32, i32) {
    %c0_i32 = arith.constant 0 : i32
    %c0_i32_0 = arith.constant 0 : i32
    %c0_i32_1 = arith.constant 0 : i32
    return %c0_i32, %c0_i32_0 : i32, i32
  }
  func.func @transform_6(%arg0: i32) -> (i32, i32) {
    %c0_i32 = arith.constant 0 : i32
    %c0_i32_0 = arith.constant 0 : i32
    %c0_i32_1 = arith.constant 0 : i32
    return %c0_i32, %c0_i32_0 : i32, i32
  }
  func.func @transform_7(%arg0: i32) -> (i32, i32) {
    %c0_i32 = arith.constant 0 : i32
    %c0_i32_0 = arith.constant 0 : i32
    return %arg0, %c0_i32 : i32, i32
  }
}

</mosaic_0001>

<llo_original>
// kernel: ellipse_rcnn_predictor.1
$region0: #{ellipse_rcnn_predictor.1}
  #allocation0 [shape = 'u32[]', space=smem, size = 0x4, offset = 0x4, fixed_abs, tag = 'smem constant byte address 0x4 - core index']
  #allocation1 [shape = 'u32[144,128]{1,0:T(1,128)}', space=vmem, size = 0x12000, scoped, tag = 'internal scratch']
  %s0 = inlined_call_operand.vmem [shape: f32[16,128], index: 0, kind: input, shape index: {}]
  %s1 = inlined_call_operand.vmem [shape: bf16[128,128], index: 1, kind: input, shape index: {}]
  %s2 = inlined_call_operand.vmem [shape: f32[1,128], index: 2, kind: input, shape index: {}]
  %s3 = inlined_call_operand.vmem [shape: f32[1,128], index: 3, kind: input, shape index: {}]
  %s4 = inlined_call_operand.vmem [shape: bf16[128,128], index: 4, kind: input, shape index: {}]
  %s5 = inlined_call_operand.vmem [shape: f32[1,128], index: 5, kind: input, shape index: {}]
  %s6 = inlined_call_operand.vmem [shape: f32[1,128], index: 6, kind: input, shape index: {}]
  %s7 = inlined_call_operand.vmem [shape: f32[16,128], index: 7, kind: output, shape index: {}]
  %s8 = sld [smem:[#allocation0]]
  $region38: #{ellipse_rcnn_predictor.1} parent=0
    _
  %s10 = ssub.s32 1, %s8
  %s11 = scalar_select 0, %s10, %s8
  // Predicated region
  $region2: #{ellipse_rcnn_predictor.1} parent=0 // pred_check
    _
  $region3: #{ellipse_rcnn_predictor.1} parent=0 // pred_check_branch
    %13 = sbr.rel (0) target = $region5
  $region4: #{ellipse_rcnn_predictor.1} parent=0 // pred_region
    _
  $region5: #{ellipse_rcnn_predictor.1} parent=0 // pred_fallthru
    _
  // Predicated region
  $region6: #{ellipse_rcnn_predictor.1} parent=0 // pred_check
    _
  $region7: #{ellipse_rcnn_predictor.1} parent=0 // pred_check_branch
    %15 = sbr.rel (0) target = $region9
  $region8: #{ellipse_rcnn_predictor.1} parent=0 // pred_region
    _
  $region9: #{ellipse_rcnn_predictor.1} parent=0 // pred_fallthru
    _
  // Predicated region
  $region10: #{ellipse_rcnn_predictor.1} parent=0 // pred_check
    _
  $region11: #{ellipse_rcnn_predictor.1} parent=0 // pred_check_branch
    %17 = sbr.rel (0) target = $region13
  $region12: #{ellipse_rcnn_predictor.1} parent=0 // pred_region
    _
  $region13: #{ellipse_rcnn_predictor.1} parent=0 // pred_fallthru
    _
  // Predicated region
  $region14: #{ellipse_rcnn_predictor.1} parent=0 // pred_check
    _
  $region15: #{ellipse_rcnn_predictor.1} parent=0 // pred_check_branch
    %19 = sbr.rel (0) target = $region17
  $region16: #{ellipse_rcnn_predictor.1} parent=0 // pred_region
    _
  $region17: #{ellipse_rcnn_predictor.1} parent=0 // pred_fallthru
    _
  // Predicated region
  $region18: #{ellipse_rcnn_predictor.1} parent=0 // pred_check
    _
  $region19: #{ellipse_rcnn_predictor.1} parent=0 // pred_check_branch
    %21 = sbr.rel (0) target = $region21
  $region20: #{ellipse_rcnn_predictor.1} parent=0 // pred_region
    _
  $region21: #{ellipse_rcnn_predictor.1} parent=0 // pred_fallthru
    _
  // Predicated region
  $region22: #{ellipse_rcnn_predictor.1} parent=0 // pred_check
    _
  $region23: #{ellipse_rcnn_predictor.1} parent=0 // pred_check_branch
    %23 = sbr.rel (0) target = $region25
  $region24: #{ellipse_rcnn_predictor.1} parent=0 // pred_region
    _
  $region25: #{ellipse_rcnn_predictor.1} parent=0 // pred_fallthru
    _
  // Predicated region
  $region26: #{ellipse_rcnn_predictor.1} parent=0 // pred_check
    _
  $region27: #{ellipse_rcnn_predictor.1} parent=0 // pred_check_branch
    %25 = sbr.rel (0) target = $region29
  $region28: #{ellipse_rcnn_predictor.1} parent=0 // pred_region
    _
  $region29: #{ellipse_rcnn_predictor.1} parent=0 // pred_fallthru
    _
  %v27 = vld [vmem:[%s0] sm:$0xff]
  %v28 = vld [vmem:[%s0 + $0x8] sm:$0xff]
  %v29 = vpack.c.bf16 %v28, %v27
  %v30 = vld [vmem:[%s1] sm:$0xf]
  %v31 = vld [vmem:[%s1 + $0x4] sm:$0xf]
  %v32 = vld [vmem:[%s1 + $0x8] sm:$0xf]
  %v33 = vld [vmem:[%s1 + $0xc] sm:$0xf]
  %v34 = vld [vmem:[%s1 + $0x10] sm:$0xf]
  %v35 = vld [vmem:[%s1 + $0x14] sm:$0xf]
  %v36 = vld [vmem:[%s1 + $0x18] sm:$0xf]
  %v37 = vld [vmem:[%s1 + $0x1c] sm:$0xf]
  %v38 = vld [vmem:[%s1 + $0x20] sm:$0xf]
  %v39 = vld [vmem:[%s1 + $0x24] sm:$0xf]
  %v40 = vld [vmem:[%s1 + $0x28] sm:$0xf]
  %v41 = vld [vmem:[%s1 + $0x2c] sm:$0xf]
  %v42 = vld [vmem:[%s1 + $0x30] sm:$0xf]
  %v43 = vld [vmem:[%s1 + $0x34] sm:$0xf]
  %v44 = vld [vmem:[%s1 + $0x38] sm:$0xf]
  %v45 = vld [vmem:[%s1 + $0x3c] sm:$0xf]
  %v46 = vld [vmem:[%s2] sm:$0x1]
  %v48 = vlaneseq
  %v49 = vshrl.u32 %v48, 7
  %v50 = vsub.s32 0, %v49
  %v51 = vrot.slane %v46, %v50
  %v69 = vunpack.c.l.b16 %v30
  %v70 = vunpack.c.l.b16 %v31
  %v71 = vunpack.c.l.b16 %v32
  %v72 = vunpack.c.l.b16 %v33
  %v73 = vunpack.c.l.b16 %v34
  %v74 = vunpack.c.l.b16 %v35
  %v75 = vunpack.c.l.b16 %v36
  %v76 = vunpack.c.l.b16 %v37
  %v77 = vunpack.c.l.b16 %v38
  %v78 = vunpack.c.l.b16 %v39
  %v79 = vunpack.c.l.b16 %v40
  %v80 = vunpack.c.l.b16 %v41
  %v81 = vunpack.c.l.b16 %v42
  %v82 = vunpack.c.l.b16 %v43
  %v83 = vunpack.c.l.b16 %v44
  %v84 = vunpack.c.l.b16 %v45
  %v85 = vpack.c.b16 %v70, %v69
  %v86 = vpack.c.b16 %v72, %v71
  %v87 = vpack.c.b16 %v74, %v73
  %v88 = vpack.c.b16 %v76, %v75
  %v89 = vpack.c.b16 %v78, %v77
  %v90 = vpack.c.b16 %v80, %v79
  %v91 = vpack.c.b16 %v82, %v81
  %v92 = vpack.c.b16 %v84, %v83
  %101 = vmatprep.subr.bf16.mxu0 0
  %102 = vmatpush1.bf16.msra.mxu0 %v92
  %103 = vmatprep.subr.bf16.mxu0 0
  %104 = vmatpush1.bf16.msra.mxu0 %v91
  %105 = vmatprep.subr.bf16.mxu0 0
  %106 = vmatpush1.bf16.msra.mxu0 %v90
  %107 = vmatprep.subr.bf16.mxu0 0
  %108 = vmatpush1.bf16.msra.mxu0 %v89
  %109 = vmatprep.subr.bf16.mxu0 0
  %110 = vmatpush1.bf16.msra.mxu0 %v88
  %111 = vmatprep.subr.bf16.mxu0 0
  %112 = vmatpush1.bf16.msra.mxu0 %v87
  %113 = vmatprep.subr.bf16.mxu0 0
  %114 = vmatpush1.bf16.msra.mxu0 %v86
  %115 = vmatprep.subr.bf16.mxu0 0
  %116 = vmatpush1.bf16.msra.mxu0 %v85
  %117 = vmatprep.subr.bf16.mxu0 0
  %118 = vmatpush2.bf16.msra.mxu0 0
  %119 = vmatprep.subr.bf16.mxu0 0
  %120 = vmatpush2.bf16.msra.mxu0 0
  %121 = vmatprep.subr.bf16.mxu0 0
  %122 = vmatpush2.bf16.msra.mxu0 0
  %123 = vmatprep.subr.bf16.mxu0 0
  %124 = vmatpush2.bf16.msra.mxu0 0
  %125 = vmatprep.subr.bf16.mxu0 0
  %126 = vmatpush2.bf16.msra.mxu0 0
  %127 = vmatprep.subr.bf16.mxu0 0
  %128 = vmatpush2.bf16.msra.mxu0 0
  %129 = vmatprep.subr.bf16.mxu0 0
  %130 = vmatpush2.bf16.msra.mxu0 0
  %131 = vmatprep.subr.bf16.mxu0 0
  %132 = vmatpush2.bf16.msra.mxu0 0
  %133 = vmatprep.mubr.bf16.mxu0 0
  %134 = vmatmul.mubr.bf16.gmra.mxu0 %v29
  %v135 = vpop.f32.mrf.mxu0
  %v136 = vadd.f32 %v51, %v135
  %v137 = vpop.f32.mrf.mxu0
  %v138 = vpop.f32.mrf.mxu0
  %v139 = vadd.f32 %v51, %v138
  %v140 = vpop.f32.mrf.mxu0
  %141 = vdwg.mxu0
  %v142 = vld [vmem:[%s3] sm:$0x1]
  %v144 = vlaneseq
  %v145 = vshrl.u32 %v144, 7
  %v146 = vsub.s32 0, %v145
  %v147 = vrot.slane %v142, %v146
  %v149 = vmul.f32 %v136, %v147
  %v150 = vmul.f32 %v139, %v147
  %v151 = vmax.f32 %v136, %v149
  %v152 = vmax.f32 %v139, %v150
  %v153 = vpack.c.bf16 %v152, %v151
  %v154 = vld [vmem:[%s4] sm:$0xf]
  %v155 = vld [vmem:[%s4 + $0x4] sm:$0xf]
  %v156 = vld [vmem:[%s4 + $0x8] sm:$0xf]
  %v157 = vld [vmem:[%s4 + $0xc] sm:$0xf]
  %v158 = vld [vmem:[%s4 + $0x10] sm:$0xf]
  %v159 = vld [vmem:[%s4 + $0x14] sm:$0xf]
  %v160 = vld [vmem:[%s4 + $0x18] sm:$0xf]
  %v161 = vld [vmem:[%s4 + $0x1c] sm:$0xf]
  %v162 = vld [vmem:[%s4 + $0x20] sm:$0xf]
  %v163 = vld [vmem:[%s4 + $0x24] sm:$0xf]
  %v164 = vld [vmem:[%s4 + $0x28] sm:$0xf]
  %v165 = vld [vmem:[%s4 + $0x2c] sm:$0xf]
  %v166 = vld [vmem:[%s4 + $0x30] sm:$0xf]
  %v167 = vld [vmem:[%s4 + $0x34] sm:$0xf]
  %v168 = vld [vmem:[%s4 + $0x38] sm:$0xf]
  %v169 = vld [vmem:[%s4 + $0x3c] sm:$0xf]
  %v170 = vld [vmem:[%s5] sm:$0x1]
  %v172 = vlaneseq
  %v173 = vshrl.u32 %v172, 7
  %v174 = vsub.s32 0, %v173
  %v175 = vrot.slane %v170, %v174
  %v193 = vunpack.c.l.b16 %v154
  %v194 = vunpack.c.l.b16 %v155
  %v195 = vunpack.c.l.b16 %v156
  %v196 = vunpack.c.l.b16 %v157
  %v197 = vunpack.c.l.b16 %v158
  %v198 = vunpack.c.l.b16 %v159
  %v199 = vunpack.c.l.b16 %v160
  %v200 = vunpack.c.l.b16 %v161
  %v201 = vunpack.c.l.b16 %v162
  %v202 = vunpack.c.l.b16 %v163
  %v203 = vunpack.c.l.b16 %v164
  %v204 = vunpack.c.l.b16 %v165
  %v205 = vunpack.c.l.b16 %v166
  %v206 = vunpack.c.l.b16 %v167
  %v207 = vunpack.c.l.b16 %v168
  %v208 = vunpack.c.l.b16 %v169
  %v209 = vpack.c.b16 %v194, %v193
  %v210 = vpack.c.b16 %v196, %v195
  %v211 = vpack.c.b16 %v198, %v197
  %v212 = vpack.c.b16 %v200, %v199
  %v213 = vpack.c.b16 %v202, %v201
  %v214 = vpack.c.b16 %v204, %v203
  %v215 = vpack.c.b16 %v206, %v205
  %v216 = vpack.c.b16 %v208, %v207
  %225 = vmatprep.subr.bf16.mxu0 0
  %226 = vmatpush1.bf16.msra.mxu0 %v216
  %227 = vmatprep.subr.bf16.mxu0 0
  %228 = vmatpush1.bf16.msra.mxu0 %v215
  %229 = vmatprep.subr.bf16.mxu0 0
  %230 = vmatpush1.bf16.msra.mxu0 %v214
  %231 = vmatprep.subr.bf16.mxu0 0
  %232 = vmatpush1.bf16.msra.mxu0 %v213
  %233 = vmatprep.subr.bf16.mxu0 0
  %234 = vmatpush1.bf16.msra.mxu0 %v212
  %235 = vmatprep.subr.bf16.mxu0 0
  %236 = vmatpush1.bf16.msra.mxu0 %v211
  %237 = vmatprep.subr.bf16.mxu0 0
  %238 = vmatpush1.bf16.msra.mxu0 %v210
  %239 = vmatprep.subr.bf16.mxu0 0
  %240 = vmatpush1.bf16.msra.mxu0 %v209
  %241 = vmatprep.subr.bf16.mxu0 0
  %242 = vmatpush2.bf16.msra.mxu0 0
  %243 = vmatprep.subr.bf16.mxu0 0
  %244 = vmatpush2.bf16.msra.mxu0 0
  %245 = vmatprep.subr.bf16.mxu0 0
  %246 = vmatpush2.bf16.msra.mxu0 0
  %247 = vmatprep.subr.bf16.mxu0 0
  %248 = vmatpush2.bf16.msra.mxu0 0
  %249 = vmatprep.subr.bf16.mxu0 0
  %250 = vmatpush2.bf16.msra.mxu0 0
  %251 = vmatprep.subr.bf16.mxu0 0
  %252 = vmatpush2.bf16.msra.mxu0 0
  %253 = vmatprep.subr.bf16.mxu0 0
  %254 = vmatpush2.bf16.msra.mxu0 0
  %255 = vmatprep.subr.bf16.mxu0 0
  %256 = vmatpush2.bf16.msra.mxu0 0
  %257 = vmatprep.mubr.bf16.mxu0 0
  %258 = vmatmul.mubr.bf16.gmra.mxu0 %v153
  %v259 = vpop.f32.mrf.mxu0
  %v260 = vadd.f32 %v175, %v259
  %v261 = vpop.f32.mrf.mxu0
  %v262 = vpop.f32.mrf.mxu0
  %v263 = vadd.f32 %v175, %v262
  %v264 = vpop.f32.mrf.mxu0
  %265 = vdwg.mxu0
  %v266 = vld [vmem:[%s6] sm:$0x1]
  %vm267 = vcmp.ne.f32.partialorder %v266, 0.0
  %v268 = vand.u32 2147483647, %v260
  %vm269 = vcmp.le.f32.partialorder %v268, 0.7853982
  %vm270 = vcmp.lt.s32.totalorder %v260, 0
  %v271 = vand.u32 %v260, 2139095040
  %v272 = vshrl.u32 %v271, 23
  %v273 = vsub.s32 %v272, 127
  %v274 = vand.u32 2147483647, %v260
  %v275 = vand.u32 %v274, 8388607
  %v276 = vor.u32 %v275, 8388608
  %v277 = vsub.s32 0, %v276
  %v278 = vadd.s32 %v273, 1
  %vm279 = vcmp.gt.s32.totalorder %v278, 0
  %v280 = vsel %vm279, %v278, 0
  %v281 = vshrl.u32 %v280, 5
  %v282 = vand.u32 %v280, 31
  %v283 = vsub.s32 32, %v282
  %v284 = vshrl.u32 683565275, %v283
  %v285 = vshll.u32 683565275, %v282
  %v286 = vshrl.u32 2475754826, %v283
  %v287 = vor.u32 %v285, %v286
  %v288 = vshll.u32 2475754826, %v282
  %v289 = vshrl.u32 2131351028, %v283
  %v290 = vor.u32 %v288, %v289
  %v291 = vshll.u32 2131351028, %v282
  %v292 = vshrl.u32 2102212464, %v283
  %v293 = vor.u32 %v291, %v292
  %v294 = vshll.u32 2102212464, %v282
  %v295 = vshrl.u32 920167782, %v283
  %v296 = vor.u32 %v294, %v295
  %v297 = vshll.u32 920167782, %v282
  %v298 = vshrl.u32 1326507024, %v283
  %v299 = vor.u32 %v297, %v298
  %vm300 = vcmp.lt.s32.totalorder %v281, 1
  %vm301 = vcmp.lt.s32.totalorder %v281, 2
  %vm302 = vcmp.lt.s32.totalorder %v281, 3
  %vm303 = vcmp.lt.s32.totalorder %v281, 4
  %v304 = vsel %vm300, %v284, %v287
  %v305 = vsel %vm303, %v293, 2102212464
  %v306 = vsel %vm302, %v290, %v305
  %v307 = vsel %vm301, %v304, %v306
  %v308 = vsel %vm300, %v287, %v290
  %v309 = vsel %vm303, %v296, 920167782
  %v310 = vsel %vm302, %v293, %v309
  %v311 = vsel %vm301, %v308, %v310
  %v312 = vsel %vm300, %v290, %v293
  %v313 = vsel %vm303, %v299, 1326507024
  %v314 = vsel %vm302, %v296, %v313
  %v315 = vsel %vm301, %v312, %v314
  %v316 = vshll.u32 %v276, 8
  %v317 = vmul.u32.u64.compose %v316, %v315
  %v318 = vextract.low.u32 %v317
  %v319 = vextract.high.u32 %v317
  %v320 = vmul.u32.u64.compose %v316, %v311
  %v321 = vextract.low.u32 %v320
  %v322 = vextract.high.u32 %v320
  %v323 = vmul.u32 %v316, %v307
  %v324 = vadd.s32 %v319, %v321
  %vm325 = vc.u32 %v319, %v321
  %v326 = vadd.s32 %v322, 1
  %v327 = vsel %vm325, %v326, %v322
  %v328 = vadd.s32 %v323, %v327
  %v329 = vadd.s32 %v328, 536870912
  %v330 = vshrl.u32 %v329, 30
  %v331 = vshll.u32 %v330, 30
  %v332 = vsub.s32 %v328, %v331
  %vm333 = vcmp.lt.s32.totalorder %v332, 0
  %v334 = vsub.s32 0, %v332
  %v335 = vsel %vm333, %v334, %v332
  %v336 = vclz %v335
  %v337 = vsub.s32 %v336, 2
  %vm338 = vcmp.gt.s32.totalorder 0, %v337
  %v339 = vsel %vm338, 0, %v337
  %v340 = vsub.s32 32, %v339
  %v341 = vshll.u32 %v332, %v339
  %v342 = vshrl.u32 %v324, %v340
  %v343 = vor.u32 %v341, %v342
  %v344 = vsub.s32 4294967266, %v339
  %v345 = vadd.s32 %v344, 127
  %v346 = vshll.u32 %v345, 23
  %v347 = vor.u32 4788187, %v346
  %v348 = vand.u32 2147483647, %v347
  %v350 = vcvt.s32.f32 %v343
  %v351 = vmul.f32 %v350, %v348
  %v352 = vxor.u32 %v351, 2147483648
  %v353 = vsel %vm270, %v352, %v351
  %v354 = vsub.s32 4, %v330
  %v355 = vsel %vm270, %v354, %v330
  %v356 = vsel %vm269, %v260, %v353
  %v357 = vsel %vm269, 0, %v355
  %v358 = vcosq.f32.pop %v356
  %v359 = vsinq.f32.pop %v356
  %vm360 = vweird.f32 %v260
  %v361 = vadd.s32 %v357, 3
  %v362 = vand.u32 %v361, 3
  %vm363 = vcmp.lt.s32.totalorder %v362, 2
  %vm364 = vcmp.eq.s32.totalorder %v362, 0
  %v365 = vxor.u32 %v359, 2147483648
  %v366 = vsel %vm364, %v358, %v365
  %vm367 = vcmp.eq.s32.totalorder %v362, 2
  %v368 = vxor.u32 %v358, 2147483648
  %v369 = vsel %vm367, %v368, %v359
  %v370 = vsel %vm363, %v366, %v369
  %v371 = vsel %vm360, nan, %v370
  %v372 = vand.u32 2147483647, %v263
  %vm373 = vcmp.le.f32.partialorder %v372, 0.7853982
  %vm374 = vcmp.lt.s32.totalorder %v263, 0
  %v375 = vand.u32 %v263, 2139095040
  %v376 = vshrl.u32 %v375, 23
  %v377 = vsub.s32 %v376, 127
  %v378 = vand.u32 2147483647, %v263
  %v379 = vand.u32 %v378, 8388607
  %v380 = vor.u32 %v379, 8388608
  %v381 = vsub.s32 0, %v380
  %v382 = vadd.s32 %v377, 1
  %vm383 = vcmp.gt.s32.totalorder %v382, 0
  %v384 = vsel %vm383, %v382, 0
  %v385 = vshrl.u32 %v384, 5
  %v386 = vand.u32 %v384, 31
  %v387 = vsub.s32 32, %v386
  %v388 = vshrl.u32 683565275, %v387
  %v389 = vshll.u32 683565275, %v386
  %v390 = vshrl.u32 2475754826, %v387
  %v391 = vor.u32 %v389, %v390
  %v392 = vshll.u32 2475754826, %v386
  %v393 = vshrl.u32 2131351028, %v387
  %v394 = vor.u32 %v392, %v393
  %v395 = vshll.u32 2131351028, %v386
  %v396 = vshrl.u32 2102212464, %v387
  %v397 = vor.u32 %v395, %v396
  %v398 = vshll.u32 2102212464, %v386
  %v399 = vshrl.u32 920167782, %v387
  %v400 = vor.u32 %v398, %v399
  %v401 = vshll.u32 920167782, %v386
  %v402 = vshrl.u32 1326507024, %v387
  %v403 = vor.u32 %v401, %v402
  %vm404 = vcmp.lt.s32.totalorder %v385, 1
  %vm405 = vcmp.lt.s32.totalorder %v385, 2
  %vm406 = vcmp.lt.s32.totalorder %v385, 3
  %vm407 = vcmp.lt.s32.totalorder %v385, 4
  %v408 = vsel %vm404, %v388, %v391
  %v409 = vsel %vm407, %v397, 2102212464
  %v410 = vsel %vm406, %v394, %v409
  %v411 = vsel %vm405, %v408, %v410
  %v412 = vsel %vm404, %v391, %v394
  %v413 = vsel %vm407, %v400, 920167782
  %v414 = vsel %vm406, %v397, %v413
  %v415 = vsel %vm405, %v412, %v414
  %v416 = vsel %vm404, %v394, %v397
  %v417 = vsel %vm407, %v403, 1326507024
  %v418 = vsel %vm406, %v400, %v417
  %v419 = vsel %vm405, %v416, %v418
  %v420 = vshll.u32 %v380, 8
  %v421 = vmul.u32.u64.compose %v420, %v419
  %v422 = vextract.low.u32 %v421
  %v423 = vextract.high.u32 %v421
  %v424 = vmul.u32.u64.compose %v420, %v415
  %v425 = vextract.low.u32 %v424
  %v426 = vextract.high.u32 %v424
  %v427 = vmul.u32 %v420, %v411
  %v428 = vadd.s32 %v423, %v425
  %vm429 = vc.u32 %v423, %v425
  %v430 = vadd.s32 %v426, 1
  %v431 = vsel %vm429, %v430, %v426
  %v432 = vadd.s32 %v427, %v431
  %v433 = vadd.s32 %v432, 536870912
  %v434 = vshrl.u32 %v433, 30
  %v435 = vshll.u32 %v434, 30
  %v436 = vsub.s32 %v432, %v435
  %vm437 = vcmp.lt.s32.totalorder %v436, 0
  %v438 = vsub.s32 0, %v436
  %v439 = vsel %vm437, %v438, %v436
  %v440 = vclz %v439
  %v441 = vsub.s32 %v440, 2
  %vm442 = vcmp.gt.s32.totalorder 0, %v441
  %v443 = vsel %vm442, 0, %v441
  %v444 = vsub.s32 32, %v443
  %v445 = vshll.u32 %v436, %v443
  %v446 = vshrl.u32 %v428, %v444
  %v447 = vor.u32 %v445, %v446
  %v448 = vsub.s32 4294967266, %v443
  %v449 = vadd.s32 %v448, 127
  %v450 = vshll.u32 %v449, 23
  %v451 = vor.u32 4788187, %v450
  %v452 = vand.u32 2147483647, %v451
  %v454 = vcvt.s32.f32 %v447
  %v455 = vmul.f32 %v454, %v452
  %v456 = vxor.u32 %v455, 2147483648
  %v457 = vsel %vm374, %v456, %v455
  %v458 = vsub.s32 4, %v434
  %v459 = vsel %vm374, %v458, %v434
  %v460 = vsel %vm373, %v263, %v457
  %v461 = vsel %vm373, 0, %v459
  %v462 = vcosq.f32.pop %v460
  %v463 = vsinq.f32.pop %v460
  %vm464 = vweird.f32 %v263
  %v465 = vadd.s32 %v461, 3
  %v466 = vand.u32 %v465, 3
  %vm467 = vcmp.lt.s32.totalorder %v466, 2
  %vm468 = vcmp.eq.s32.totalorder %v466, 0
  %v469 = vxor.u32 %v463, 2147483648
  %v470 = vsel %vm468, %v462, %v469
  %vm471 = vcmp.eq.s32.totalorder %v466, 2
  %v472 = vxor.u32 %v462, 2147483648
  %v473 = vsel %vm471, %v472, %v463
  %v474 = vsel %vm467, %v470, %v473
  %v475 = vsel %vm464, nan, %v474
  %v476 = vsel %vm267, 1, 0
  %v477 = vlaneseq
  %v478 = vshrl.u32 %v477, 7
  %v479 = vsub.s32 0, %v478
  %v480 = vrot.slane %v476, %v479
  %vm481 = vcmp.eq.s32.totalorder %v480, 1
  %v482 = vsel %vm481, %v371, %v260
  %v483 = vsel %vm481, %v475, %v263
  %484 = vst [vmem:[%s7] sm:$0xff] %v482
  %485 = vst [vmem:[%s7 + $0x8] sm:$0xff] %v483
  // Predicated region
  $region30: #{ellipse_rcnn_predictor.1} parent=0 // pred_check
    _
  $region31: #{ellipse_rcnn_predictor.1} parent=0 // pred_check_branch
    %487 = sbr.rel (0) target = $region33
  $region32: #{ellipse_rcnn_predictor.1} parent=0 // pred_region
    _
  $region33: #{ellipse_rcnn_predictor.1} parent=0 // pred_fallthru
    _
  // Predicated region
  $region34: #{ellipse_rcnn_predictor.1} parent=0 // pred_check
    _
  $region35: #{ellipse_rcnn_predictor.1} parent=0 // pred_check_branch
    %489 = sbr.rel (0) target = $region37
  $region36: #{ellipse_rcnn_predictor.1} parent=0 // pred_region
    _
  $region37: #{ellipse_rcnn_predictor.1} parent=0 // pred_fallthru
    _

</llo_original>
